<compile_context>
chip_gen: v6e
topology: v6e:2x2x1
jax: 0.10.0
libtpu: 0.0.40
codegen_flags: <defaults>
</compile_context>

<pallas_src>
import functools
import math

import numpy as np
import jax
import jax.numpy as jnp
from jax.experimental import pallas as pl
from jax.experimental.pallas import tpu as pltpu


_MXU_DTYPE = jnp.bfloat16      # MXU operand dtype (accumulate in f32)
_NEG = -1e30                   # finite "-inf" for masked maxima


@functools.lru_cache(maxsize=None)
def _vmem_limit():
    # ~48 MiB on v7x (64 MiB physical), 96 MiB on v5e/v6e (128 MiB physical).
    try:
        cap = int(pltpu.get_tpu_info().vmem_capacity_bytes)
    except Exception:
        cap = 64 * 1024 * 1024
    return int(max(32 * 1024 * 1024, min(96 * 1024 * 1024, (cap * 3) // 4)))


def _round_up(v, m):
    return ((v + m - 1) // m) * m


# ------------------------------------------------------------------------------ kernels

def linear_kernel(x_ref, w_ref, b_ref, o_ref):
    # y = x @ W + b  (tiny: only used for the fixed 240-row RTE table)
    o_ref[...] = (
        jnp.dot(x_ref[...], w_ref[...], preferred_element_type=jnp.float32) + b_ref[...]
    )


def typed_linear_kernel(x_ref, oh_ref, w_ref, b_ref, o_ref, *, num_types, out_dim,
                        activation):
    # per-type Linear(in -> out) as one wide matmul [in, T*out] + one-hot select.
    x16 = x_ref[...].astype(_MXU_DTYPE)
    y = jnp.dot(x16, w_ref[...], preferred_element_type=jnp.float32) + b_ref[...]
    oh = oh_ref[...]
    out = jnp.zeros((x_ref.shape[0], out_dim), jnp.float32)
    for t in range(num_types):
        out = out + oh[:, t:t + 1] * y[:, t * out_dim:(t + 1) * out_dim]
    if activation == "tanh":
        out = jnp.tanh(out)
    o_ref[...] = out.astype(o_ref.dtype)


def update_kernel(aggr_ref, x_ref, oh_ref, w_ref, b_ref, alpha_ref, o_ref, *,
                  num_types, n_hid):
    # HGTConv.update: exact GELU -> typed A-linear -> sigmoid-skip residual (no norm).
    h = jax.nn.gelu(aggr_ref[...], approximate=False)
    y = (jnp.dot(h.astype(_MXU_DTYPE), w_ref[...], preferred_element_type=jnp.float32)
         + b_ref[...])                                                 # [tN, T*n_hid]
    oh = oh_ref[...]
    sel = jnp.zeros(o_ref.shape, jnp.float32)
    for t in range(num_types):
        sel = sel + oh[:, t:t + 1] * y[:, t * n_hid:(t + 1) * n_hid]
    a = jnp.dot(oh, alpha_ref[...], preferred_element_type=jnp.float32)  # [tN, 1]
    o_ref[...] = sel * a + x_ref[...] * (1.0 - a)


def hgt_layer_kernel(ebmap_ref, ebcnt_ref,
                     meta_ref, xsr_ref, q_ref,
                     wkv_ref, bkv_ref, watt_ref, wmsg_ref,
                     pri_ref, pool_ref, poolt_ref,
                     aggr_ref,
                     m_scr, l_scr, acc_scr,
                     *, num_types, num_relations, node_tile):
    # Fused HGT message + softmax + segment-aggregate for one (node tile i, slot k).
    # Running state (VMEM scratch, row-major over the node tile):
    #   m_scr  [1, H]    per-head running block max
    #   l_scr  [tN, H]   per-target softmax denominator
    #   acc_scr[tN, nh]  per-target weighted-message accumulator
    i = pl.program_id(0)
    k = pl.program_id(1)

    @pl.when(k == 0)
    def _init():
        m_scr[...] = jnp.full(m_scr.shape, _NEG, dtype=m_scr.dtype)
        l_scr[...] = jnp.zeros(l_scr.shape, dtype=l_scr.dtype)
        acc_scr[...] = jnp.zeros(acc_scr.shape, dtype=acc_scr.dtype)

    @pl.when(k < ebcnt_ref[i])
    def _step():
        te = meta_ref.shape[0]
        nh = xsr_ref.shape[1]

        meta = meta_ref[...]                      # [tE, 3] int32: (tgt, src_type, rel)
        tgt = meta[:, 0:1]
        stype = meta[:, 1:2]
        rel = meta[:, 2:3]

        base = i * node_tile
        belongs = jnp.logical_and(tgt >= base, tgt < base + node_tile)     # [tE, 1]
        node_ids = jax.lax.broadcasted_iota(jnp.int32, (te, node_tile), 1) + base
        oh_et16 = (tgt == node_ids).astype(jnp.float32).astype(_MXU_DTYPE)  # [tE, tN]
        ohs = (stype == jax.lax.broadcasted_iota(jnp.int32, (te, num_types), 1)
               ).astype(jnp.float32)                                       # [tE, T]
        ohr = (rel == jax.lax.broadcasted_iota(jnp.int32, (te, num_relations), 1)
               ).astype(jnp.float32)                                       # [tE, R]

        xsr = xsr_ref[...]                                                  # bf16

        # typed K|V projection of (x_src + RTE), selected by source type
        kv = jnp.zeros((te, 2 * nh), jnp.float32)
        for t in range(num_types):
            yt = (jnp.dot(xsr, wkv_ref[t], preferred_element_type=jnp.float32)
                  + bkv_ref[t])
            kv = kv + ohs[:, t:t + 1] * yt
        k_typed = kv[:, :nh].astype(_MXU_DTYPE)
        v_typed = kv[:, nh:].astype(_MXU_DTYPE)

        # per-relation head-wise d_k x d_k transforms (block-diagonal weights)
        k_rel = jnp.zeros((te, nh), jnp.float32)
        msg = jnp.zeros((te, nh), jnp.float32)
        for r in range(num_relations):
            sel = ohr[:, r:r + 1]
            k_rel = k_rel + sel * jnp.dot(k_typed, watt_ref[r],
                                          preferred_element_type=jnp.float32)
            msg = msg + sel * jnp.dot(v_typed, wmsg_ref[r],
                                      preferred_element_type=jnp.float32)

        # per-edge Q gathered from this tile's resident per-node Q block
        q16 = q_ref[...].astype(_MXU_DTYPE)                                  # [tN, nh]
        q_e = jnp.dot(oh_et16, q16, preferred_element_type=jnp.float32)      # [tE, nh]

        # attention logits (relation_pri is pre-scaled by 1/sqrt(d_k) on the host)
        pri_e = jnp.dot(ohr, pri_ref[...], preferred_element_type=jnp.float32)  # [tE,H]
        s = jnp.dot((q_e * k_rel).astype(_MXU_DTYPE), pool_ref[...],
                    preferred_element_type=jnp.float32) * pri_e                 # [tE,H]

        # per-head block max over edges of this tile (softmax is shift invariant;
        # logit spreads > ~80 inside a tile would underflow the f32 denominator).
        bm = jnp.max(jnp.where(belongs, s, _NEG), axis=0, keepdims=True)     # [1, H]
        m_old = m_scr[...]
        m_new = jnp.maximum(m_old, bm)
        rescale = jnp.exp(m_old - m_new)                                     # [1, H]

        p = jnp.exp(jnp.where(belongs, s - m_new, _NEG))                     # [tE, H]
        p16 = p.astype(_MXU_DTYPE)
        poolt16 = poolt_ref[...].astype(_MXU_DTYPE)
        p_full = jnp.dot(p16, poolt16, preferred_element_type=jnp.float32)   # [tE, nh]
        weighted16 = (msg * p_full).astype(_MXU_DTYPE)

        # segment ("scatter") sums via bf16 one-hot matmuls, row-major node layout
        l_add = jax.lax.dot_general(oh_et16, p16, (((0,), (0,)), ((), ())),
                                    preferred_element_type=jnp.float32)      # [tN, H]
        acc_add = jax.lax.dot_general(oh_et16, weighted16,
                                      (((0,), (0,)), ((), ())),
                                      preferred_element_type=jnp.float32)    # [tN, nh]

        acc_scale = jnp.dot(rescale, poolt_ref[...],
                            preferred_element_type=jnp.float32)              # [1, nh]
        m_scr[...] = m_new
        l_scr[...] = l_scr[...] * rescale + l_add
        acc_scr[...] = acc_scr[...] * acc_scale + acc_add

    @pl.when(k == pl.num_programs(1) - 1)
    def _finalize():
        l_full = jnp.dot(l_scr[...], poolt_ref[...],
                         preferred_element_type=jnp.float32)                 # [tN, nh]
        # Isolated targets (l == 0) get aggr = 0, like PyG scatter_add.
        aggr_ref[...] = jnp.where(l_full > 0.0, acc_scr[...] / l_full, 0.0)


# ------------------------------------------------------------------------------ wrappers

def pallas_linear(x, w, b):
    m = x.shape[0]
    out = w.shape[1]
    vm = pl.BlockSpec(memory_space=pltpu.MemorySpace.VMEM)
    return pl.pallas_call(
        linear_kernel,
        out_shape=jax.ShapeDtypeStruct((m, out), jnp.float32),
        in_specs=[vm, vm, vm],
        out_specs=vm,
    )(x, w, b)


def pallas_typed_linear(x, oh_node, w_cat, b_cat, *, node_tile, out_dim, num_types,
                        activation=None, out_dtype=jnp.float32):
    n_pad, in_dim = x.shape
    kern = functools.partial(typed_linear_kernel, num_types=num_types,
                             out_dim=out_dim, activation=activation)
    return pl.pallas_call(
        kern,
        out_shape=jax.ShapeDtypeStruct((n_pad, out_dim), out_dtype),
        grid=(n_pad // node_tile,),
        in_specs=[
            pl.BlockSpec((node_tile, in_dim), lambda i: (i, 0)),
            pl.BlockSpec((node_tile, num_types), lambda i: (i, 0)),
            pl.BlockSpec((in_dim, num_types * out_dim), lambda i: (0, 0)),
            pl.BlockSpec((1, num_types * out_dim), lambda i: (0, 0)),
        ],
        out_specs=pl.BlockSpec((node_tile, out_dim), lambda i: (i, 0)),
        compiler_params=pltpu.CompilerParams(
            dimension_semantics=("parallel",), vmem_limit_bytes=_vmem_limit()),
    )(x, oh_node, w_cat, b_cat)


def pallas_update(aggr, x, oh_node, wa_cat, ba_cat, alpha_col, *, node_tile, n_hid,
                  num_types):
    n_pad = aggr.shape[0]
    kern = functools.partial(update_kernel, num_types=num_types, n_hid=n_hid)
    return pl.pallas_call(
        kern,
        out_shape=jax.ShapeDtypeStruct((n_pad, n_hid), jnp.float32),
        grid=(n_pad // node_tile,),
        in_specs=[
            pl.BlockSpec((node_tile, n_hid), lambda i: (i, 0)),
            pl.BlockSpec((node_tile, n_hid), lambda i: (i, 0)),
            pl.BlockSpec((node_tile, num_types), lambda i: (i, 0)),
            pl.BlockSpec((n_hid, num_types * n_hid), lambda i: (0, 0)),
            pl.BlockSpec((1, num_types * n_hid), lambda i: (0, 0)),
            pl.BlockSpec((num_types, 1), lambda i: (0, 0)),
        ],
        out_specs=pl.BlockSpec((node_tile, n_hid), lambda i: (i, 0)),
        compiler_params=pltpu.CompilerParams(
            dimension_semantics=("parallel",), vmem_limit_bytes=_vmem_limit()),
    )(aggr, x, oh_node, wa_cat, ba_cat, alpha_col)


def hgt_attention_aggregate(meta, xsr, q_nodes, wkv, bkv, watt, wmsg, pri, pool, poolt,
                            ebmap, ebcnt, *, n_pad, node_tile, edge_tile, n_heads,
                            num_types, num_relations, max_slots, single_buffer_weights):
    e_pad, n_hid = xsr.shape
    num_nt = n_pad // node_tile
    T, R, H = num_types, num_relations, n_heads

    def em(i, k, m, c):     # edge-block-tiled operands (data-dependent tiling)
        return (m[i, k], 0)

    def nm(i, k, m, c):     # node-tile operand, resident across the slot axis
        return (i, 0)

    def c2(i, k, m, c):
        return (0, 0)

    def c3(i, k, m, c):
        return (0, 0, 0)

    def const_spec(shape, imap):
        # Constant weights: a single VMEM copy (default double buffering would waste
        # VMEM; critical on v7x's 64 MiB).
        if single_buffer_weights:
            return pl.BlockSpec(shape, imap, pipeline_mode=pl.Buffered(1))
        return pl.BlockSpec(shape, imap)

    kern = functools.partial(hgt_layer_kernel, num_types=T, num_relations=R,
                             node_tile=node_tile)

    grid_spec = pltpu.PrefetchScalarGridSpec(
        num_scalar_prefetch=2,
        grid=(num_nt, max_slots),
        in_specs=[
            pl.BlockSpec((edge_tile, 3), em),            # int32 (tgt, src_type, rel)
            pl.BlockSpec((edge_tile, n_hid), em),        # bf16 x_src + RTE
            pl.BlockSpec((node_tile, n_hid), nm),        # per-node Q (hoisted)
            const_spec((T, n_hid, 2 * n_hid), c3),       # typed [K|V] weights (bf16)
            const_spec((T, 1, 2 * n_hid), c3),           # typed [K|V] bias
            const_spec((R, n_hid, n_hid), c3),           # block-diag relation_att
            const_spec((R, n_hid, n_hid), c3),           # block-diag relation_msg
            const_spec((R, H), c2),                      # relation_pri / sqrt(d_k)
            const_spec((n_hid, H), c2),                  # head pooling (bf16)
            const_spec((H, n_hid), c2),                  # its transpose (f32)
        ],
        out_specs=pl.BlockSpec((node_tile, n_hid), lambda i, k, m, c: (i, 0)),
        scratch_shapes=[
            pltpu.VMEM((1, H), jnp.float32),
            pltpu.VMEM((node_tile, H), jnp.float32),
            pltpu.VMEM((node_tile, n_hid), jnp.float32),
        ],
    )
    return pl.pallas_call(
        kern,
        out_shape=jax.ShapeDtypeStruct((n_pad, n_hid), jnp.float32),
        grid_spec=grid_spec,
        compiler_params=pltpu.CompilerParams(
            dimension_semantics=("parallel", "arbitrary"),
            vmem_limit_bytes=_vmem_limit()),
    )(ebmap, ebcnt, meta, xsr, q_nodes, wkv, bkv, watt, wmsg, pri, pool, poolt)


_SINGLE_BUFFER_WEIGHTS = [True]


def _edge_aggregate(*args, **kwargs):
    # Prefer single-buffered constant weights; fall back if this jax build rejects
    # pipeline_mode=pl.Buffered(1).
    if _SINGLE_BUFFER_WEIGHTS[0]:
        try:
            return hgt_attention_aggregate(*args, single_buffer_weights=True, **kwargs)
        except Exception:
            _SINGLE_BUFFER_WEIGHTS[0] = False
    return hgt_attention_aggregate(*args, single_buffer_weights=False, **kwargs)


# ------------------------------------------------------------------------------ params

def init_params(key, in_dim, n_hid, num_types, num_relations, n_heads, n_layers,
                max_len=240):
    d_k = n_hid // n_heads
    keys = iter(jax.random.split(key, 8 + n_layers * 16))

    def lin(fan_in, fan_out, n=None):
        kw, kb = jax.random.split(next(keys))
        bound = 1.0 / math.sqrt(fan_in)
        if n is None:
            w = jax.random.uniform(kw, (fan_in, fan_out), jnp.float32, -bound, bound)
            b = jax.random.uniform(kb, (1, fan_out), jnp.float32, -bound, bound)
        else:
            w = jax.random.uniform(kw, (n, fan_in, fan_out), jnp.float32, -bound, bound)
            b = jax.random.uniform(kb, (n, 1, fan_out), jnp.float32, -bound, bound)
        return w, b

    params = {}
    params["adapt_w"], params["adapt_b"] = lin(in_dim, n_hid, num_types)

    # fixed sinusoidal RelTemporalEncoding table
    position = jnp.arange(max_len, dtype=jnp.float32)[:, None]
    div_term = jnp.exp(jnp.arange(0, n_hid, 2, dtype=jnp.float32)
                       * (-math.log(10000.0) / n_hid))
    emb = jnp.zeros((max_len, n_hid), jnp.float32)
    emb = emb.at[:, 0::2].set(jnp.sin(position * div_term) / math.sqrt(n_hid))
    emb = emb.at[:, 1::2].set(jnp.cos(position * div_term) / math.sqrt(n_hid))
    params["rte_emb"] = emb

    glorot_a = math.sqrt(6.0 / (d_k + d_k))
    layers = []
    for _ in range(n_layers):
        lp = {}
        lp["k_w"], lp["k_b"] = lin(n_hid, n_hid, num_types)
        lp["q_w"], lp["q_b"] = lin(n_hid, n_hid, num_types)
        lp["v_w"], lp["v_b"] = lin(n_hid, n_hid, num_types)
        lp["a_w"], lp["a_b"] = lin(n_hid, n_hid, num_types)
        lp["rte_w"], lp["rte_b"] = lin(n_hid, n_hid)
        lp["rel_att"] = jax.random.uniform(next(keys),
                                           (num_relations, n_heads, d_k, d_k),
                                           jnp.float32, -glorot_a, glorot_a)
        lp["rel_msg"] = jax.random.uniform(next(keys),
                                           (num_relations, n_heads, d_k, d_k),
                                           jnp.float32, -glorot_a, glorot_a)
        lp["rel_pri"] = jnp.ones((num_relations, n_heads), jnp.float32)
        lp["skip"] = jnp.ones((num_types,), jnp.float32)
        layers.append(lp)
    params["layers"] = layers
    return params


def _prepare_layer_weights(lp, num_types, num_relations, n_heads, d_k):
    T, n_hid, _ = lp["q_w"].shape
    R, H = num_relations, n_heads
    # Q (hoisted to node level): wide per-type weight for the one-hot-select kernel.
    wq_cat = jnp.transpose(lp["q_w"], (1, 0, 2)).reshape(
        n_hid, T * n_hid).astype(_MXU_DTYPE)
    bq_cat = jnp.transpose(lp["q_b"], (1, 0, 2)).reshape(1, T * n_hid)
    # typed [K|V] per source type (no relation folding -> R x fewer weight bytes).
    wkv = jnp.concatenate([lp["k_w"], lp["v_w"]], axis=-1).astype(_MXU_DTYPE)
    bkv = jnp.concatenate([lp["k_b"], lp["v_b"]], axis=-1)
    # per-relation head-wise d_k x d_k transforms as block-diagonal [n_hid, n_hid].
    watt = jnp.zeros((R, n_hid, n_hid), jnp.float32)
    wmsg = jnp.zeros((R, n_hid, n_hid), jnp.float32)
    for h in range(H):
        sl = slice(h * d_k, (h + 1) * d_k)
        watt = watt.at[:, sl, sl].set(lp["rel_att"][:, h])
        wmsg = wmsg.at[:, sl, sl].set(lp["rel_msg"][:, h])
    pri_scaled = lp["rel_pri"] / math.sqrt(d_k)       # fold 1/sqrt(d_k) into pri
    return (wq_cat, bq_cat, wkv, bkv,
            watt.astype(_MXU_DTYPE), wmsg.astype(_MXU_DTYPE), pri_scaled)


def _build_segments(tgt_sorted, n_pad, node_tile, e_pad, edge_tile):
    # For each node tile, the contiguous range of edge blocks that may contain its
    # incoming edges (edges sorted by target).  Dead slots are clamped to the last
    # valid block (and empty tiles to the previous tile's block) so that skipped
    # steps keep the block index unchanged and Pallas elides the DMA.
    num_nt = n_pad // node_tile
    num_eb = max(1, e_pad // edge_tile)
    starts = np.zeros(num_nt, np.int64)
    counts = np.zeros(num_nt, np.int64)
    for i in range(num_nt):
        lo = np.searchsorted(tgt_sorted, i * node_tile, side="left")
        hi = np.searchsorted(tgt_sorted, (i + 1) * node_tile, side="left")
        if hi > lo:
            starts[i] = lo // edge_tile
            counts[i] = (hi + edge_tile - 1) // edge_tile - starts[i]
    max_slots = int(max(1, counts.max()))
    ebmap = np.zeros((num_nt, max_slots), np.int32)
    last = 0
    for i in range(num_nt):
        if counts[i] > 0:
            last_valid = min(int(starts[i] + counts[i] - 1), num_eb - 1)
            for k in range(max_slots):
                ebmap[i, k] = min(int(starts[i]) + k, last_valid)
            last = last_valid
        else:
            ebmap[i, :] = last
    return (jnp.asarray(ebmap, jnp.int32),
            jnp.asarray(counts.astype(np.int32)), max_slots)


# ------------------------------------------------------------------------------ forward

def hgat_forward(params, node_feature, node_type, edge_index, edge_type, edge_time,
                 num_types, num_relations, n_heads, node_tile=128, edge_tile=512):
    n_nodes, in_dim = node_feature.shape
    n_hid = params["adapt_w"].shape[2]
    d_k = n_hid // n_heads
    e_real = edge_index.shape[1]

    node_tile = _round_up(min(node_tile, _round_up(n_nodes, 8)), 8)
    edge_tile = _round_up(min(edge_tile, _round_up(e_real, 16)), 16)
    assert node_tile % 8 == 0 and edge_tile % 16 == 0
    n_pad = _round_up(n_nodes, node_tile)
    e_pad = _round_up(e_real, edge_tile)

    # ---- host-side graph preprocessing: sort edges by target, pad, segment tables
    src = np.asarray(edge_index[0])
    tgt = np.asarray(edge_index[1])
    rel = np.asarray(edge_type)
    tim = np.asarray(edge_time)
    ntype_np = np.asarray(node_type).astype(np.int64)
    order = np.argsort(tgt, kind="stable")
    src_s, tgt_s, rel_s, tim_s = src[order], tgt[order], rel[order], tim[order]
    pad = e_pad - e_real
    src_p = np.concatenate([src_s, np.zeros(pad, src_s.dtype)]).astype(np.int64)
    rel_p = np.concatenate([rel_s, np.zeros(pad, rel_s.dtype)]).astype(np.int64)
    tim_p = np.concatenate([tim_s, np.zeros(pad, tim_s.dtype)]).astype(np.int64)
    tgt_meta = np.concatenate([tgt_s.astype(np.int64), np.full(pad, -1, np.int64)])
    stype_p = ntype_np[src_p]
    meta_np = np.stack([tgt_meta, stype_p, rel_p], axis=1).astype(np.int32)  # [e_pad,3]
    ebmap, ebcnt, max_slots = _build_segments(tgt_s, n_pad, node_tile, e_pad, edge_tile)

    # ---- device-side static tensors
    x_feat = jnp.zeros((n_pad, in_dim), jnp.float32).at[:n_nodes].set(node_feature)
    ntype = jnp.zeros((n_pad,), jnp.int32).at[:n_nodes].set(
        jnp.asarray(ntype_np, jnp.int32))
    oh_node = jax.nn.one_hot(ntype, num_types, dtype=jnp.float32)
    src_d = jnp.asarray(src_p, jnp.int32)
    time_d = jnp.asarray(tim_p, jnp.int32)
    meta_d = jnp.asarray(meta_np, jnp.int32)
    pool_f32 = jnp.repeat(jnp.eye(n_heads, dtype=jnp.float32), d_k, axis=0)   # [nh, H]
    pool16 = pool_f32.astype(_MXU_DTYPE)
    poolt = pool_f32.T                                                        # [H, nh]

    # ---- GNN adapt: per-type Linear + tanh (dropout = identity in eval)
    w_cat = jnp.transpose(params["adapt_w"], (1, 0, 2)).reshape(
        in_dim, num_types * n_hid).astype(_MXU_DTYPE)
    b_cat = jnp.transpose(params["adapt_b"], (1, 0, 2)).reshape(1, num_types * n_hid)
    x = pallas_typed_linear(x_feat, oh_node, w_cat, b_cat, node_tile=node_tile,
                            out_dim=n_hid, num_types=num_types, activation="tanh")

    for lp in params["layers"]:
        (wq_cat, bq_cat, wkv, bkv, watt, wmsg, pri_scaled) = _prepare_layer_weights(
            lp, num_types, num_relations, n_heads, d_k)

        rte_table = pallas_linear(params["rte_emb"], lp["rte_w"], lp["rte_b"])
        # TODO(synk): move these per-edge gathers into the Pallas pipeline with
        #             scalar-prefetched pl.Element index maps instead of jnp.take glue.
        rte_e = jnp.take(rte_table, time_d, axis=0)
        x_src = jnp.take(x, src_d, axis=0)
        xsr_e = (x_src + rte_e).astype(_MXU_DTYPE)       # one bf16 edge stream

        # per-node typed Q projection (hoisted out of the edge kernel)
        q_nodes = pallas_typed_linear(x, oh_node, wq_cat, bq_cat, node_tile=node_tile,
                                      out_dim=n_hid, num_types=num_types)

        aggr = _edge_aggregate(
            meta_d, xsr_e, q_nodes, wkv, bkv, watt, wmsg, pri_scaled, pool16, poolt,
            ebmap, ebcnt,
            n_pad=n_pad, node_tile=node_tile, edge_tile=edge_tile, n_heads=n_heads,
            num_types=num_types, num_relations=num_relations, max_slots=max_slots)

        wa_cat = jnp.transpose(lp["a_w"], (1, 0, 2)).reshape(
            n_hid, num_types * n_hid).astype(_MXU_DTYPE)
        ba_cat = jnp.transpose(lp["a_b"], (1, 0, 2)).reshape(1, num_types * n_hid)
        alpha_col = jax.nn.sigmoid(lp["skip"]).reshape(num_types, 1)
        x = pallas_update(aggr, x, oh_node, wa_cat, ba_cat, alpha_col,
                          node_tile=node_tile, n_hid=n_hid, num_types=num_types)
    return x[:n_nodes]


# ------------------------------------------------------------------------------ main

if __name__ == "__main__":
    in_dim, out_dim = 16, 32
    num_types, num_relations, n_heads, n_layers = 2, 3, 4, 2
    N, E = 16, 32

    key = jax.random.PRNGKey(0)
    ks = jax.random.split(key, 6)
    node_feature = jax.random.normal(ks[0], (N, in_dim), dtype=jnp.float32)
    node_type = jax.random.randint(ks[1], (N,), 0, num_types)
    edge_index = jax.random.randint(ks[2], (2, E), 0, N)
    edge_type = jax.random.randint(ks[3], (E,), 0, num_relations)
    edge_time = jax.random.randint(ks[4], (E,), 0, 240)

    params = init_params(ks[5], in_dim, out_dim, num_types, num_relations,
                         n_heads, n_layers)

    # Small tiles so the test exercises multiple node tiles and edge blocks
    # (use e.g. node_tile=128 / edge_tile=512 for real graphs).
    out = hgat_forward(params, node_feature, node_type, edge_index, edge_type,
                       edge_time, num_types, num_relations, n_heads,
                       node_tile=8, edge_tile=16)
    jax.block_until_ready(out)
    assert out.shape == (N, out_dim)
    assert bool(jnp.all(jnp.isfinite(out)))
    print("KERNEL_OK")
</pallas_src>

<mosaic_0001>
module attributes {stable_mosaic.version = 11 : i64} {
  func.func @typed_linear_kernel(%arg0: i32, %arg1: memref<8x16xf32, #tpu.memory_space<vmem>>, %arg2: memref<8x2xf32, #tpu.memory_space<vmem>>, %arg3: memref<16x64xbf16, #tpu.memory_space<vmem>>, %arg4: memref<1x64xf32, #tpu.memory_space<vmem>>, %arg5: memref<8x32xf32, #tpu.memory_space<vmem>>) attributes {dimension_semantics = [#tpu.dimension_semantics<parallel>], iteration_bounds = array<i64: 2>, scalar_prefetch = 0 : i64, scratch_operands = 0 : i64, tpu.core_type = #tpu.core_type<tc>, window_params = [{transform_indices = @transform_0, window_bounds = array<i64: 8, 16>}, {transform_indices = @transform_1, window_bounds = array<i64: 8, 2>}, {pipeline_mode = #tpu.pipeline_mode<synchronous>, transform_indices = @transform_2, window_bounds = array<i64: 16, 64>}, {pipeline_mode = #tpu.pipeline_mode<synchronous>, transform_indices = @transform_3, window_bounds = array<i64: 1, 64>}, {transform_indices = @transform_4, window_bounds = array<i64: 8, 32>}]} {
    %c0 = arith.constant 0 : index
    %c0_0 = arith.constant 0 : index
    %0 = vector.load %arg1[%c0, %c0_0] : memref<8x16xf32, #tpu.memory_space<vmem>>, vector<8x16xf32>
    %1 = arith.truncf %0 : vector<8x16xf32> to vector<8x16xbf16>
    %c0_1 = arith.constant 0 : index
    %c0_2 = arith.constant 0 : index
    %2 = vector.load %arg3[%c0_1, %c0_2] : memref<16x64xbf16, #tpu.memory_space<vmem>>, vector<16x64xbf16>
    %cst = arith.constant dense<0.000000e+00> : vector<8x64xf32>
    %3 = tpu.matmul %1, %2, %cst {dimension_numbers = #tpu.dot_dimension_numbers<[1], [0], [0], [1], [0, 0, 1, 1], [], []>} : vector<8x16xbf16>, vector<16x64xbf16>, vector<8x64xf32> -> vector<8x64xf32>
    %c0_3 = arith.constant 0 : index
    %c0_4 = arith.constant 0 : index
    %4 = vector.load %arg4[%c0_3, %c0_4] : memref<1x64xf32, #tpu.memory_space<vmem>>, vector<1x64xf32>
    %5 = vector.broadcast %4 : vector<1x64xf32> to vector<8x64xf32>
    %6 = arith.addf %3, %5 : vector<8x64xf32>
    %c0_5 = arith.constant 0 : index
    %c0_6 = arith.constant 0 : index
    %7 = vector.load %arg2[%c0_5, %c0_6] : memref<8x2xf32, #tpu.memory_space<vmem>>, vector<8x2xf32>
    %cst_7 = arith.constant 0.000000e+00 : f32
    %8 = vector.broadcast %cst_7 : f32 to vector<8x32xf32>
    %9 = vector.extract_strided_slice %7 {offsets = [0, 0], sizes = [8, 1], strides = [1, 1]} : vector<8x2xf32> to vector<8x1xf32>
    %10 = vector.extract_strided_slice %6 {offsets = [0, 0], sizes = [8, 32], strides = [1, 1]} : vector<8x64xf32> to vector<8x32xf32>
    %11 = vector.broadcast %9 : vector<8x1xf32> to vector<8x32xf32>
    %12 = arith.mulf %11, %10 : vector<8x32xf32>
    %13 = arith.addf %8, %12 : vector<8x32xf32>
    %14 = vector.extract_strided_slice %7 {offsets = [0, 1], sizes = [8, 1], strides = [1, 1]} : vector<8x2xf32> to vector<8x1xf32>
    %15 = vector.extract_strided_slice %6 {offsets = [0, 32], sizes = [8, 32], strides = [1, 1]} : vector<8x64xf32> to vector<8x32xf32>
    %16 = vector.broadcast %14 : vector<8x1xf32> to vector<8x32xf32>
    %17 = arith.mulf %16, %15 : vector<8x32xf32>
    %18 = arith.addf %13, %17 : vector<8x32xf32>
    %19 = math.tanh %18 : vector<8x32xf32>
    %c0_8 = arith.constant 0 : index
    %c0_9 = arith.constant 0 : index
    %20 = vector.load %arg5[%c0_8, %c0_9] : memref<8x32xf32, #tpu.memory_space<vmem>>, vector<8x32xf32>
    tpu.vector_store %arg5[%c0_8, %c0_9], %19 {strides = array<i32>} : memref<8x32xf32, #tpu.memory_space<vmem>>, vector<8x32xf32>,
    return
  }
  func.func @transform_0(%arg0: i32) -> (i32, i32) {
    %c0_i32 = arith.constant 0 : i32
    %c0_i32_0 = arith.constant 0 : i32
    return %arg0, %c0_i32 : i32, i32
  }
  func.func @transform_1(%arg0: i32) -> (i32, i32) {
    %c0_i32 = arith.constant 0 : i32
    %c0_i32_0 = arith.constant 0 : i32
    return %arg0, %c0_i32 : i32, i32
  }
  func.func @transform_2(%arg0: i32) -> (i32, i32) {
    %c0_i32 = arith.constant 0 : i32
    %c0_i32_0 = arith.constant 0 : i32
    %c0_i32_1 = arith.constant 0 : i32
    return %c0_i32, %c0_i32_0 : i32, i32
  }
  func.func @transform_3(%arg0: i32) -> (i32, i32) {
    %c0_i32 = arith.constant 0 : i32
    %c0_i32_0 = arith.constant 0 : i32
    %c0_i32_1 = arith.constant 0 : i32
    return %c0_i32, %c0_i32_0 : i32, i32
  }
  func.func @transform_4(%arg0: i32) -> (i32, i32) {
    %c0_i32 = arith.constant 0 : i32
    %c0_i32_0 = arith.constant 0 : i32
    return %arg0, %c0_i32 : i32, i32
  }
}

</mosaic_0001>

<llo_original>
// kernel: tpu_custom_call.1
$region0: #{tpu_custom_call.1}
  #allocation0 [shape = 'u32[]', space=smem, size = 0x4, offset = 0x4, fixed_abs, tag = 'smem constant byte address 0x4 - core index']
  #allocation1 [shape = 'u32[144,128]{1,0:T(1,128)}', space=vmem, size = 0x12000, scoped, tag = 'internal scratch']
  %s0 = inlined_call_operand.vmem [shape: f32[16,16], index: 0, kind: input, shape index: {}]
  %s1 = inlined_call_operand.vmem [shape: f32[16,2], index: 1, kind: input, shape index: {}]
  %s2 = inlined_call_operand.hbm [shape: bf16[16,64], index: 2, kind: input, shape index: {}]
  %s3 = inlined_call_operand.vmem [shape: f32[1,64], index: 3, kind: input, shape index: {}]
  %s4 = inlined_call_operand.hbm [shape: f32[16,32], index: 4, kind: output, shape index: {}]
  %s5 = sld [smem:[#allocation0]]
  $region53: #{tpu_custom_call.1} parent=0
    _
  %s7 = ssub.s32 1, %s5
  %s8 = scalar_select 0, %s7, %s5
  $region1: #{tpu_custom_call.1} parent=0
    #allocation2 [shape = 'u8[4096]{0}', space=vmem, size = 0x1000, scoped, tag = 'input window, operand 2, single buffered']
    #allocation3 [shape = 's32[2]{0}', space=sflag, size = 0x8, scoped, tag = 'scoped memory for tpu_custom_call.1']
    #allocation4 [shape = 's32[2]{0}', space=sflag, size = 0x8, scoped, tag = 'scoped memory for tpu_custom_call.1']
    #allocation5 [shape = 'u8[8192]{0}', space=vmem, size = 0x2000, scoped, tag = 'output window, operand 0']
    %9 = vsyncpa [#allocation3], 0
    %10 = vsyncpa [#allocation4], 0
    %s11 = scalar_lea.sflag [#allocation4], 1
    %12 = vsyncpa %s11, 0
    loop: start=0, step=1, limit=4
    $region2: #{tpu_custom_call.1} parent=1 // loop_pre_header
      _
    $region3: #{tpu_custom_call.1} parent=1 // loop_header
      %s14 = sphi 0, %s18
      %p15 = scmp.ge.s32.totalorder %s14, 4
      %s24 = sphi 0, %s26
      %s27 = sphi 0, %s24
      %s28 = sphi 0, %s27
      %s44 = sphi 0, %s28
      %s50 = sphi 0, %s52
      %s53 = sphi 0, %s50
      %s54 = sphi 0, %s53
      %s70 = sphi 0, %s54
      %s74 = sphi 0, %s74
      %s76 = sphi 0, %s74
      %s77 = sphi 0, %s76
      %s91 = sphi 0, %s77
      %s95 = sphi 0, %s95
      %s97 = sphi 0, %s95
      %s98 = sphi 0, %s97
      %s112 = sphi 0, %s98
      %s118 = sphi 0, %s120
      %s121 = sphi 0, %s118
      %s122 = sphi 0, %s121
      %s138 = sphi 0, %s122
    $region4: #{tpu_custom_call.1} parent=1 // loop_header_branch
      %17 = sbr.rel (%p15) target = $region8
    $region5: #{tpu_custom_call.1} parent=1 // loop_body
      %s19 = ssub.s32 %s14, 1
      %s20 = ssub.s32 %s14, 2
      %s21 = sadd.s32 %s14, 1
      %s22 = ssub.s32 %s14, %s21
      %p23 = scmp.eq.s32.totalorder %s22, 0
      %s25 = sadd.s32 %s24, 1
      %s26 = scalar_select %p23, %s24, %s25
      %p29 = pneg %p23
      %p30 = scmp.eq.s32.totalorder %s14, 1
      %p31 = por %p29, %p30
      %p32 = scmp.ne.s32.totalorder %s24, %s27
      %p33 = scmp.eq.s32.totalorder %s14, 0
      %p34 = por %p32, %p33
      %p35 = scmp.ne.s32.totalorder %s24, %s27
      %p36 = scmp.eq.s32.totalorder %s19, 1
      %p37 = por %p35, %p36
      %p38 = scmp.ne.s32.totalorder %s27, %s28
      %p39 = scmp.eq.s32.totalorder %s19, 0
      %p40 = por %p38, %p39
      %p41 = scmp.ne.s32.totalorder %s27, %s28
      %p42 = scmp.eq.s32.totalorder %s20, 1
      %p43 = por %p41, %p42
      %p45 = scmp.ne.s32.totalorder %s28, %s44
      %p46 = scmp.eq.s32.totalorder %s20, 0
      %p47 = por %p45, %p46
      %s48 = ssub.s32 %s14, %s21
      %p49 = scmp.eq.s32.totalorder %s48, 0
      %s51 = sadd.s32 %s50, 1
      %s52 = scalar_select %p49, %s50, %s51
      %p55 = pneg %p49
      %p56 = scmp.eq.s32.totalorder %s14, 1
      %p57 = por %p55, %p56
      %p58 = scmp.ne.s32.totalorder %s50, %s53
      %p59 = scmp.eq.s32.totalorder %s14, 0
      %p60 = por %p58, %p59
      %p61 = scmp.ne.s32.totalorder %s50, %s53
      %p62 = scmp.eq.s32.totalorder %s19, 1
      %p63 = por %p61, %p62
      %p64 = scmp.ne.s32.totalorder %s53, %s54
      %p65 = scmp.eq.s32.totalorder %s19, 0
      %p66 = por %p64, %p65
      %p67 = scmp.ne.s32.totalorder %s53, %s54
      %p68 = scmp.eq.s32.totalorder %s20, 1
      %p69 = por %p67, %p68
      %p71 = scmp.ne.s32.totalorder %s54, %s70
      %p72 = scmp.eq.s32.totalorder %s20, 0
      %p73 = por %p71, %p72
      %s75 = sadd.s32 %s74, 1
      %p78 = scmp.eq.s32.totalorder %s14, 1
      %p79 = scmp.ne.s32.totalorder %s74, %s76
      %p80 = scmp.eq.s32.totalorder %s14, 0
      %p81 = por %p79, %p80
      %p82 = scmp.ne.s32.totalorder %s74, %s76
      %p83 = scmp.eq.s32.totalorder %s19, 1
      %p84 = por %p82, %p83
      %p85 = scmp.ne.s32.totalorder %s76, %s77
      %p86 = scmp.eq.s32.totalorder %s19, 0
      %p87 = por %p85, %p86
      %p88 = scmp.ne.s32.totalorder %s76, %s77
      %p89 = scmp.eq.s32.totalorder %s20, 1
      %p90 = por %p88, %p89
      %p92 = scmp.ne.s32.totalorder %s77, %s91
      %p93 = scmp.eq.s32.totalorder %s20, 0
      %p94 = por %p92, %p93
      %s96 = sadd.s32 %s95, 1
      %p99 = scmp.eq.s32.totalorder %s14, 1
      %p100 = scmp.ne.s32.totalorder %s95, %s97
      %p101 = scmp.eq.s32.totalorder %s14, 0
      %p102 = por %p100, %p101
      %p103 = scmp.ne.s32.totalorder %s95, %s97
      %p104 = scmp.eq.s32.totalorder %s19, 1
      %p105 = por %p103, %p104
      %p106 = scmp.ne.s32.totalorder %s97, %s98
      %p107 = scmp.eq.s32.totalorder %s19, 0
      %p108 = por %p106, %p107
      %p109 = scmp.ne.s32.totalorder %s97, %s98
      %p110 = scmp.eq.s32.totalorder %s20, 1
      %p111 = por %p109, %p110
      %p113 = scmp.ne.s32.totalorder %s98, %s112
      %p114 = scmp.eq.s32.totalorder %s20, 0
      %p115 = por %p113, %p114
      %s116 = ssub.s32 %s14, %s21
      %p117 = scmp.eq.s32.totalorder %s116, 0
      %s119 = sadd.s32 %s118, 1
      %s120 = scalar_select %p117, %s118, %s119
      %p123 = pneg %p117
      %p124 = scmp.eq.s32.totalorder %s14, 1
      %p125 = por %p123, %p124
      %p126 = scmp.ne.s32.totalorder %s118, %s121
      %p127 = scmp.eq.s32.totalorder %s14, 0
      %p128 = por %p126, %p127
      %p129 = scmp.ne.s32.totalorder %s118, %s121
      %p130 = scmp.eq.s32.totalorder %s19, 1
      %p131 = por %p129, %p130
      %p132 = scmp.ne.s32.totalorder %s121, %s122
      %p133 = scmp.eq.s32.totalorder %s19, 0
      %p134 = por %p132, %p133
      %p135 = scmp.ne.s32.totalorder %s121, %s122
      %p136 = scmp.eq.s32.totalorder %s20, 1
      %p137 = por %p135, %p136
      %p139 = scmp.ne.s32.totalorder %s122, %s138
      %p140 = scmp.eq.s32.totalorder %s20, 0
      %p141 = por %p139, %p140
      %p142 = scmp.le.s32.totalorder 1, %s14
      %p143 = scmp.lt.s32.totalorder %s14, 3
      %p144 = pnand %p142, %p143
      %p145 = pneg %p144
      // Predicated region
      $region9: #{tpu_custom_call.1} parent=5 // pred_check
        _
      $region10: #{tpu_custom_call.1} parent=5 // pred_check_branch
        %147 = sbr.rel (%p144) target = $region12
      $region11: #{tpu_custom_call.1} parent=5 // pred_region
        %s148 = ssub.s32 %s14, 1
        // Predicated region
        $region13: #{tpu_custom_call.1} parent=11 // pred_check
          %p149 = pneg %p87
        $region14: #{tpu_custom_call.1} parent=11 // pred_check_branch
          %151 = sbr.rel (%p149) target = $region16
        $region15: #{tpu_custom_call.1} parent=11 // pred_region
          %s153 = ssub.s32 128, 128
          %154 = vsyncadd [#allocation3], %s153
          %s155 = sshll.u32 [#allocation2], 4
          %s156 = int_to_ptr.vmem [resolvable:$true] %s155
          %161 = dma.hbm_to_vmem [thread:$0]  %s2, 128, %s156, [#allocation3], 64, 64, 4
        $region16: #{tpu_custom_call.1} parent=11 // pred_fallthru
          _
        // Predicated region
        $region17: #{tpu_custom_call.1} parent=11 // pred_check
          %p162 = pneg %p108
        $region18: #{tpu_custom_call.1} parent=11 // pred_check_branch
          %164 = sbr.rel (%p162) target = $region20
        $region19: #{tpu_custom_call.1} parent=11 // pred_region
          _
        $region20: #{tpu_custom_call.1} parent=11 // pred_fallthru
          _
      $region12: #{tpu_custom_call.1} parent=5 // pred_fallthru
        _
      %p165 = scmp.lt.s32.totalorder %s14, 2
      // Predicated region
      $region21: #{tpu_custom_call.1} parent=5 // pred_check
        %p166 = pneg %p165
      $region22: #{tpu_custom_call.1} parent=5 // pred_check_branch
        %168 = sbr.rel (%p166) target = $region24
      $region23: #{tpu_custom_call.1} parent=5 // pred_region
        // Predicated region
        $region25: #{tpu_custom_call.1} parent=23 // pred_check
          %p169 = pneg %p34
        $region26: #{tpu_custom_call.1} parent=23 // pred_check_branch
          %171 = sbr.rel (%p169) target = $region28
        $region27: #{tpu_custom_call.1} parent=23 // pred_region
          %p172 = scmp.lt.s32.totalorder %s14, 1
          %s173 = scalar_select %p172, %s14, 1
          %s174 = smul.addr %s173, 8
          %s175 = scalar_lea.vmem %s0, %s174
        $region28: #{tpu_custom_call.1} parent=23 // pred_fallthru
          _
        // Predicated region
        $region29: #{tpu_custom_call.1} parent=23 // pred_check
          %p176 = pneg %p60
        $region30: #{tpu_custom_call.1} parent=23 // pred_check_branch
          %178 = sbr.rel (%p176) target = $region32
        $region31: #{tpu_custom_call.1} parent=23 // pred_region
          %p179 = scmp.lt.s32.totalorder %s14, 1
          %s180 = scalar_select %p179, %s14, 1
          %s181 = smul.addr %s180, 8
          %s182 = scalar_lea.vmem %s1, %s181
        $region32: #{tpu_custom_call.1} parent=23 // pred_fallthru
          _
      $region24: #{tpu_custom_call.1} parent=5 // pred_fallthru
        _
      %p183 = scmp.le.s32.totalorder 1, %s14
      %p184 = scmp.lt.s32.totalorder %s14, 3
      %p185 = pnand %p183, %p184
      %p186 = pneg %p185
      // Predicated region
      $region33: #{tpu_custom_call.1} parent=5 // pred_check
        _
      $region34: #{tpu_custom_call.1} parent=5 // pred_check_branch
        %188 = sbr.rel (%p185) target = $region36
      $region35: #{tpu_custom_call.1} parent=5 // pred_region
        %s189 = ssub.s32 %s14, 1
        // Predicated region
        $region37: #{tpu_custom_call.1} parent=35 // pred_check
          %p190 = pneg %p87
        $region38: #{tpu_custom_call.1} parent=35 // pred_check_branch
          %192 = sbr.rel (%p190) target = $region40
        $region39: #{tpu_custom_call.1} parent=35 // pred_region
          %193 = dma.done [#allocation3], 128
        $region40: #{tpu_custom_call.1} parent=35 // pred_fallthru
          _
        %p194 = scmp.lt.s32.totalorder %s19, 1
        %s195 = scalar_select %p194, %s19, 1
        %s196 = smul.addr %s195, 8
        %s197 = scalar_lea.vmem %s0, %s196
        %p198 = pneg %p40
        %p199 = pneg %p37
        %p200 = scmp.lt.s32.totalorder %s19, 1
        %s201 = scalar_select %p200, %s19, 1
        %s202 = smul.addr %s201, 8
        %s203 = scalar_lea.vmem %s1, %s202
        %p204 = pneg %p66
        %p205 = pneg %p63
        %p206 = pneg %p87
        %p207 = pneg %p84
        %p208 = pneg %p108
        %p209 = pneg %p105
        %p210 = pneg %p134
        %p211 = pneg %p131
        %s212 = sand.u32 %s121, 1
        %s213 = scalar_lea.sflag [#allocation4], %s212
        %s214 = sand.u32 %s121, 1
        %s215 = smul.addr %s214, 8
        %s216 = scalar_lea.vmem [#allocation5], %s215
        %p217 = scmp.lt.s32.totalorder %s19, 1
        %s218 = scalar_select %p217, %s19, 1
        %s219 = smul.addr %s218, 8
        %s220 = scalar_lea.vmem %s0, %s219
        %p221 = scmp.lt.s32.totalorder %s19, 1
        %s222 = scalar_select %p221, %s19, 1
        %s223 = smul.addr %s222, 8
        %s224 = scalar_lea.vmem %s1, %s223
        %v226 = vld [vmem:[%s220] sm:$0xff]
        %v227 = vpack.c.bf16 %v226, %v226
        %v228 = vld [vmem:[#allocation2] sm:$0xf]
        %v229 = vld [vmem:[#allocation2 + $0x4] sm:$0xf]
        %v230 = vld [vmem:[%s3] sm:$0x1]
        %v232 = vlaneseq
        %v233 = vshrl.u32 %v232, 7
        %v234 = vsub.s32 0, %v233
        %v235 = vrot.slane %v230, %v234
        %v239 = vunpack.c.l.b16 %v228
        %v240 = vunpack.c.l.b16 %v229
        %v241 = vpack.c.b16 %v240, %v239
        %vm243 = vcmask 130048
        %v245 = vsel %vm243, %v227, 0
        %247 = vmatprep.subr.bf16.mxu0 0
        %248 = vmatpush1.bf16.msra.mxu0 0
        %249 = vmatprep.subr.bf16.mxu0 0
        %250 = vmatpush1.bf16.msra.mxu0 0
        %251 = vmatprep.subr.bf16.mxu0 0
        %252 = vmatpush1.bf16.msra.mxu0 0
        %253 = vmatprep.subr.bf16.mxu0 0
        %254 = vmatpush1.bf16.msra.mxu0 0
        %255 = vmatprep.subr.bf16.mxu0 0
        %256 = vmatpush1.bf16.msra.mxu0 0
        %257 = vmatprep.subr.bf16.mxu0 0
        %258 = vmatpush1.bf16.msra.mxu0 0
        %259 = vmatprep.subr.bf16.mxu0 0
        %260 = vmatpush1.bf16.msra.mxu0 0
        %261 = vmatprep.subr.bf16.mxu0 0
        %262 = vmatpush1.bf16.msra.mxu0 %v241
        %263 = vmatprep.subr.bf16.mxu0 0
        %264 = vmatpush2.bf16.msra.mxu0 0
        %265 = vmatprep.subr.bf16.mxu0 0
        %266 = vmatpush2.bf16.msra.mxu0 0
        %267 = vmatprep.subr.bf16.mxu0 0
        %268 = vmatpush2.bf16.msra.mxu0 0
        %269 = vmatprep.subr.bf16.mxu0 0
        %270 = vmatpush2.bf16.msra.mxu0 0
        %271 = vmatprep.subr.bf16.mxu0 0
        %272 = vmatpush2.bf16.msra.mxu0 0
        %273 = vmatprep.subr.bf16.mxu0 0
        %274 = vmatpush2.bf16.msra.mxu0 0
        %275 = vmatprep.subr.bf16.mxu0 0
        %276 = vmatpush2.bf16.msra.mxu0 0
        %277 = vmatprep.subr.bf16.mxu0 0
        %278 = vmatpush2.bf16.msra.mxu0 0
        %279 = vmatprep.mubr.bf16.mxu0 0
        %280 = vmatmul.mubr.bf16.gmra.mxu0 %v245
        %v281 = vpop.f32.mrf.mxu0
        %v282 = vadd.f32 %v235, %v281
        %v283 = vpop.f32.mrf.mxu0
        %v284 = vpop.f32.mrf.mxu0
        %v285 = vpop.f32.mrf.mxu0
        %286 = vdwg.mxu0
        %v287 = vld [vmem:[%s224] sm:$0xff]
        %289 = vset.pattern.permute.xlu0 0
        %290 = vperm.xlu0 %289, %v287
        %v291 = vpop.permute.xlu0 %290
        %v293 = vmul.f32 %v291, %v282
        %v294 = vadd.f32 %v293, 0.0
        %295 = vset.pattern.permute.xlu0 1
        %296 = vperm.xlu0 %295, %v287
        %v297 = vpop.permute.xlu0 %296
        %v299 = vmul.f32 %v297, %v282
        %301 = vrot.lane.b32.xlu0 %v299, 96
        %v302 = vpop.permute.xlu0 %301
        %v304 = vadd.f32 %v294, %v302
        %v305 = vtanh.pop %v304
        %vm306 = vcmask 261120
        %307 = vst.msk [vmem:[%s216] sm:$0xff] %vm306, %v305
        %s308 = sand.u32 %s121, 1
        %s309 = scalar_lea.sflag [#allocation4], %s308
        %s310 = sand.u32 %s121, 1
        %s311 = smul.addr %s310, 8
        %s312 = scalar_lea.vmem [#allocation5], %s311
        // Predicated region
        $region41: #{tpu_custom_call.1} parent=35 // pred_check
          %p313 = pneg %p131
        $region42: #{tpu_custom_call.1} parent=35 // pred_check_branch
          %315 = sbr.rel (%p313) target = $region44
        $region43: #{tpu_custom_call.1} parent=35 // pred_region
          %s317 = ssub.s32 128, 128
          %318 = vsyncadd %s309, %s317
          %s319 = smul.addr %s19, 128
          %s320 = scalar_lea.hbm %s4, %s319
          %s322 = sshll.u32 %s312, 4
          %s323 = int_to_ptr.vmem [resolvable:$true] %s322
          %325 = dma.vmem_to_hbm [thread:$0]  %s323, 128, %s320, %s309
        $region44: #{tpu_custom_call.1} parent=35 // pred_fallthru
          _
      $region36: #{tpu_custom_call.1} parent=5 // pred_fallthru
        _
      %p326 = scmp.le.s32.totalorder 2, %s14
      // Predicated region
      $region45: #{tpu_custom_call.1} parent=5 // pred_check
        %p327 = pneg %p326
      $region46: #{tpu_custom_call.1} parent=5 // pred_check_branch
        %329 = sbr.rel (%p327) target = $region48
      $region47: #{tpu_custom_call.1} parent=5 // pred_region
        %s330 = ssub.s32 %s14, 2
        // Predicated region
        $region49: #{tpu_custom_call.1} parent=47 // pred_check
          %p331 = pneg %p137
        $region50: #{tpu_custom_call.1} parent=47 // pred_check_branch
          %333 = sbr.rel (%p331) target = $region52
        $region51: #{tpu_custom_call.1} parent=47 // pred_region
          %s334 = sand.u32 %s122, 1
          %s335 = scalar_lea.sflag [#allocation4], %s334
          %s336 = sand.u32 %s122, 1
          %s337 = smul.addr %s336, 8
          %s338 = scalar_lea.vmem [#allocation5], %s337
          %339 = dma.done %s335, 128
        $region52: #{tpu_custom_call.1} parent=47 // pred_fallthru
          _
      $region48: #{tpu_custom_call.1} parent=5 // pred_fallthru
        _
    $region6: #{tpu_custom_call.1} parent=1 // loop_footer
      %s18 = sadd.s32 1, %s14
    $region7: #{tpu_custom_call.1} parent=1 // loop_footer_branch
      %13 = sbr.rel target = $region3
    $region8: #{tpu_custom_call.1} parent=1 // loop_exit
      _
    %340 = vsyncpa [#allocation3], 1
    %s341 = scalar_lea.sflag [#allocation3], 1
    %342 = vsyncpa %s341, 1
    %343 = vsyncpa [#allocation4], 1
    %s344 = scalar_lea.sflag [#allocation4], 1
    %345 = vsyncpa %s344, 1

</llo_original>
